<compile_context>
chip_gen: v7x
topology: tpu7x:2x2x1
jax: 0.10.0
libtpu: 0.0.40
codegen_flags: <defaults>
</compile_context>

<pallas_src>
import jax
import jax.numpy as jnp
import numpy as np
from jax.experimental import pallas as pl
from jax.experimental.pallas import tpu as pltpu

_MAX_LANE = 1024     # lane-dense column width (multiple of 128)
_BLOCK_ROWS = 1024   # rows per tile: 1024 x 1024 f32 = 4 MiB per block


def _copy_kernel(x_ref, o_ref):
    # Pure ref-to-ref assignment: bundle count == store count.
    o_ref[...] = x_ref[...]


def _round_up(value: int, multiple: int) -> int:
    return (value + multiple - 1) // multiple * multiple


def hrnet_forward(x: jax.Array) -> jax.Array:
    """Pallas implementation of the (stub) HRNet forward pass.

    The PyTorch forward is a no-op; we return the input unchanged, routed
    through a lane-dense, tiled, input/output-aliased Pallas copy kernel.
    """
    orig_shape = x.shape
    total = int(x.size)
    if total == 0:
        return x

    # Pick the widest lane count (multiple of 128, up to _MAX_LANE) that
    # divides the element count so no tail padding is needed in the common
    # case; fall back to 128 lanes + tail padding otherwise.
    cols = 128
    for cand in (_MAX_LANE, 512, 256, 128):
        if total % cand == 0:
            cols = cand
            break

    rows = pl.cdiv(total, cols)
    if rows <= _BLOCK_ROWS:
        # Small tensor: one full-array block (legal: block dims == array dims).
        block_rows = rows
        padded_rows = rows
    else:
        block_rows = _BLOCK_ROWS
        padded_rows = _round_up(rows, block_rows)

    padded_total = padded_rows * cols
    flat = x.reshape(-1)
    if padded_total != total:
        flat = jnp.pad(flat, (0, padded_total - total))
    x2d = flat.reshape(padded_rows, cols)

    grid = (padded_rows // block_rows,)

    y2d = pl.pallas_call(
        _copy_kernel,
        out_shape=jax.ShapeDtypeStruct((padded_rows, cols), x.dtype),
        grid=grid,
        in_specs=[pl.BlockSpec((block_rows, cols), lambda i: (i, 0))],
        out_specs=pl.BlockSpec((block_rows, cols), lambda i: (i, 0)),
        # Alias input HBM buffer to the output: no extra output allocation.
        input_output_aliases={0: 0},
        compiler_params=pltpu.CompilerParams(
            # Tiles are independent -> megacore sharding on v7x.
            dimension_semantics=("parallel",),
        ),
    )(x2d)

    y = y2d.reshape(-1)
    if padded_total != total:
        y = y[:total]
    return y.reshape(orig_shape)


if __name__ == "__main__":
    key = jax.random.PRNGKey(0)
    # Small NCHW input consistent with a semantic-segmentation network input.
    x = jax.random.normal(key, (2, 4, 16, 16), dtype=jnp.float32)
    # Snapshot the input on host before the call (the kernel aliases buffers).
    x_host = np.asarray(jax.device_get(x))

    y = hrnet_forward(x)
    jax.block_until_ready(y)
    y_host = np.asarray(jax.device_get(y))

    # Sanity check: identity semantics (the only well-defined behavior the
    # stub module admits beyond returning None).
    assert y_host.shape == x_host.shape and y_host.dtype == x_host.dtype
    assert np.array_equal(y_host, x_host)

    print("KERNEL_OK")
</pallas_src>

<mosaic_0001>
module attributes {stable_mosaic.version = 11 : i64} {
  func.func @_copy_kernel(%arg0: i32, %arg1: memref<2x1024xf32, #tpu.memory_space<vmem>>, %arg2: memref<2x1024xf32, #tpu.memory_space<vmem>>) attributes {dimension_semantics = [#tpu.dimension_semantics<parallel>], iteration_bounds = array<i64: 1>, scalar_prefetch = 0 : i64, scratch_operands = 0 : i64, tpu.core_type = #tpu.core_type<tc>, window_params = [{transform_indices = @transform_0, window_bounds = array<i64: 2, 1024>}, {transform_indices = @transform_1, window_bounds = array<i64: 2, 1024>}]} {
    %c0 = arith.constant 0 : index
    %c0_0 = arith.constant 0 : index
    %0 = vector.load %arg1[%c0, %c0_0] : memref<2x1024xf32, #tpu.memory_space<vmem>>, vector<2x1024xf32>
    %c0_1 = arith.constant 0 : index
    %c0_2 = arith.constant 0 : index
    %1 = vector.load %arg2[%c0_1, %c0_2] : memref<2x1024xf32, #tpu.memory_space<vmem>>, vector<2x1024xf32>
    tpu.vector_store %arg2[%c0_1, %c0_2], %0 {strides = array<i32>} : memref<2x1024xf32, #tpu.memory_space<vmem>>, vector<2x1024xf32>,
    return
  }
  func.func @transform_0(%arg0: i32) -> (i32, i32) {
    %c0_i32 = arith.constant 0 : i32
    %c0_i32_0 = arith.constant 0 : i32
    return %arg0, %c0_i32 : i32, i32
  }
  func.func @transform_1(%arg0: i32) -> (i32, i32) {
    %c0_i32 = arith.constant 0 : i32
    %c0_i32_0 = arith.constant 0 : i32
    return %arg0, %c0_i32 : i32, i32
  }
}

</mosaic_0001>

<llo_original>
// kernel: tpu_custom_call.1
$region0: #{tpu_custom_call.1}
  #allocation0 [shape = 'u32[]', space=smem, size = 0x4, offset = 0x4, fixed_abs, tag = 'smem constant byte address 0x4 - core index']
  #allocation1 [shape = 'u32[144,128]{1,0:T(1,128)}', space=vmem, size = 0x12000, scoped, tag = 'internal scratch']
  %s0 = inlined_call_operand.hbm [shape: f32[2,1024], index: 0, kind: input, shape index: {}, may-alias: {0,1}]
  %s1 = inlined_call_operand.hbm [shape: f32[2,1024], index: 1, kind: output, shape index: {}, may-alias: {0,1}]
  %s2 = sld [smem:[#allocation0]]
  $region18: #{tpu_custom_call.1} parent=0
    _
  %s4 = ssub.s32 1, %s2
  %s5 = scalar_select 0, %s4, %s2
  $region1: #{tpu_custom_call.1} parent=0
    #allocation2 [shape = 'u8[8192]{0}', space=vmem, size = 0x2000, scoped, tag = 'input window, operand 0, single buffered']
    #allocation3 [shape = 's32[1]{0}', space=sflag, size = 0x4, scoped, tag = 'scoped memory for tpu_custom_call.1']
    #allocation4 [shape = 's32[1]{0}', space=sflag, size = 0x4, scoped, tag = 'scoped memory for tpu_custom_call.1']
    #allocation5 [shape = 'u8[8192]{0}', space=vmem, size = 0x2000, scoped, tag = 'output window, operand 0, single buffered']
    %6 = vsyncpa [#allocation3], 0
    %7 = vsyncpa [#allocation4], 0
    // Predicated region
    $region2: #{tpu_custom_call.1} parent=1 // pred_check
      _
    $region3: #{tpu_custom_call.1} parent=1 // pred_check_branch
      %9 = sbr.rel (0) target = $region5
    $region4: #{tpu_custom_call.1} parent=1 // pred_region
      %s11 = ssub.s32 256, 256
      %12 = vsyncadd [#allocation3], %s11
      %s14 = sshll.u32 [#allocation2], 4
      %s15 = int_to_ptr.vmem [resolvable:$true] %s14
      %17 = dma.hbm_to_vmem [thread:$0]  %s0, 256, %s15, [#allocation3]
    $region5: #{tpu_custom_call.1} parent=1 // pred_fallthru
      _
    // Predicated region
    $region6: #{tpu_custom_call.1} parent=1 // pred_check
      _
    $region7: #{tpu_custom_call.1} parent=1 // pred_check_branch
      %19 = sbr.rel (0) target = $region9
    $region8: #{tpu_custom_call.1} parent=1 // pred_region
      %20 = dma.done [#allocation3], 256
    $region9: #{tpu_custom_call.1} parent=1 // pred_fallthru
      _
    %v21 = vld [vmem:[#allocation2] sm:$0xff]
    %v22 = vld [vmem:[#allocation2 + $0x8] sm:$0xff]
    %23 = vst [vmem:[#allocation5] sm:$0xff] %v21
    %24 = vst [vmem:[#allocation5 + $0x8] sm:$0xff] %v22
    // Predicated region
    $region10: #{tpu_custom_call.1} parent=1 // pred_check
      _
    $region11: #{tpu_custom_call.1} parent=1 // pred_check_branch
      %26 = sbr.rel (0) target = $region13
    $region12: #{tpu_custom_call.1} parent=1 // pred_region
      %s28 = ssub.s32 256, 256
      %29 = vsyncadd [#allocation4], %s28
      %s31 = sshll.u32 [#allocation5], 4
      %s32 = int_to_ptr.vmem [resolvable:$true] %s31
      %34 = dma.vmem_to_hbm [thread:$0]  %s32, 256, %s1, [#allocation4]
    $region13: #{tpu_custom_call.1} parent=1 // pred_fallthru
      _
    // Predicated region
    $region14: #{tpu_custom_call.1} parent=1 // pred_check
      _
    $region15: #{tpu_custom_call.1} parent=1 // pred_check_branch
      %36 = sbr.rel (0) target = $region17
    $region16: #{tpu_custom_call.1} parent=1 // pred_region
      %37 = dma.done [#allocation4], 256
    $region17: #{tpu_custom_call.1} parent=1 // pred_fallthru
      _
    %38 = vsyncpa [#allocation3], 1
    %39 = vsyncpa [#allocation4], 1

</llo_original>
